<compile_context>
chip_gen: v6e
topology: v6e:2x2x1
jax: 0.10.0
libtpu: 0.0.40
codegen_flags: <defaults>
</compile_context>

<pallas_src>
import math

import jax
import jax.numpy as jnp
from jax import lax
from jax.experimental import pallas as pl
from jax.experimental.pallas import tpu as pltpu


# ----------------------------------------------------------------------------
# Parameter packing: matmul weights -> ONE bf16 slab, biases / LayerNorm /
# masks -> ONE small f32 slab.  Rows padded to x8, static offset tables.
# ----------------------------------------------------------------------------
def _pad8(n: int) -> int:
    return ((n + 7) // 8) * 8


def _pack_slab(entries, dtype):
    wpad = max(int(a.shape[1]) for _, a in entries)
    layout, blocks, off = {}, [], 0
    for name, a in entries:
        a = jnp.asarray(a, jnp.float32)
        r, c = int(a.shape[0]), int(a.shape[1])
        rp = _pad8(r)
        blocks.append(jnp.zeros((rp, wpad), jnp.float32).at[:r, :c].set(a))
        layout[name] = (off, r, c)
        off += rp
    return jnp.concatenate(blocks, axis=0).astype(dtype), layout


def _blockdiag(a, b):
    ra, ca = a.shape
    rb, cb = b.shape
    m = jnp.zeros((ra + rb, ca + cb), jnp.float32)
    m = m.at[:ra, :ca].set(a)
    m = m.at[ra:, ca:].set(b)
    return m


def _prepare_params(params, attention_type):
    f32 = jnp.float32
    attn_ws = [jnp.asarray(w, f32) for w in params["attn_ws"]]
    attn_bs = [jnp.asarray(b, f32).reshape(1, -1) for b in params["attn_bs"]]
    main_ws = [jnp.asarray(w, f32) for w in params["main_ws"]]
    main_bs = [jnp.asarray(b, f32).reshape(1, -1) for b in params["main_bs"]]
    attn_out_w = jnp.asarray(params["attn_out_w"], f32)
    attn_out_b = jnp.asarray(params["attn_out_b"], f32).reshape(1, -1)
    out_w = jnp.asarray(params["out_w"], f32)
    out_b = jnp.asarray(params["out_b"], f32).reshape(1, -1)
    ln_g = jnp.asarray(params["ln_g"], f32).reshape(1, -1)
    ln_b = jnp.asarray(params["ln_b"], f32).reshape(1, -1)

    D = int(attn_ws[0].shape[0])
    Ha = int(attn_ws[0].shape[1])
    H = int(main_ws[0].shape[1])
    W = Ha + H
    ad, d = len(attn_ws), len(main_ws)
    common = min(ad, d)
    same_depth = ad == d
    att_dim = 1 if attention_type == "per_node" else D

    w_entries, f_entries = [], []
    # layer 0: both branches consume x (width D) -> single fused (D, Ha+H) push
    w_entries.append(("w0", jnp.concatenate([attn_ws[0], main_ws[0]], axis=1)))
    f_entries.append(("b0", jnp.concatenate([attn_bs[0], main_bs[0]], axis=1)))
    # hidden layers 1..common-1: block-diagonal (Ha+H, Ha+H) -> ONE MXU push
    # drives both the attention and the value layer.
    for i in range(1, common):
        w_entries.append((f"wblk{i}", _blockdiag(attn_ws[i], main_ws[i])))
        f_entries.append((f"bblk{i}",
                          jnp.concatenate([attn_bs[i], main_bs[i]], axis=1)))
    # LayerNorm params padded to the fused width (gamma/beta zero on value
    # lanes, keep_h one on value lanes) -> masked LayerNorm, no lane re-concat.
    zH = jnp.zeros((1, H), f32)
    f_entries.append(("ln_g_pad", jnp.concatenate([ln_g, zH], axis=1)))
    f_entries.append(("ln_b_pad", jnp.concatenate([ln_b, zH], axis=1)))
    f_entries.append(("keep_h", jnp.concatenate(
        [jnp.zeros((1, Ha), f32), jnp.ones((1, H), f32)], axis=1)))
    # leftover (unfused) layers when the two branches have different depths
    for i in range(common, ad):
        w_entries.append((f"attn_w{i}", attn_ws[i]))
        f_entries.append((f"attn_b{i}", attn_bs[i]))
    for i in range(common, d):
        w_entries.append((f"main_w{i}", main_ws[i]))
        f_entries.append((f"main_b{i}", main_bs[i]))
    if ad > common:
        f_entries.append(("ln_g", ln_g))
        f_entries.append(("ln_b", ln_b))
    # output heads
    fuse_final = same_depth and attention_type == "per_element"
    if fuse_final:
        # attention_output_layer + output_layer fused block-diagonally
        w_entries.append(("wfin", _blockdiag(attn_out_w, out_w)))
        f_entries.append(("bfin", jnp.concatenate([attn_out_b, out_b], axis=1)))
    elif same_depth:   # per_node: 1-wide attention head done on the VPU
        f_entries.append(("attn_out_w_row_pad",
                          jnp.concatenate([attn_out_w.T, zH], axis=1)))
        f_entries.append(("attn_out_b", attn_out_b))
        w_entries.append(("out_w", out_w))
        f_entries.append(("out_b", out_b))
    else:
        if attention_type == "per_node":
            f_entries.append(("attn_out_w_row", attn_out_w.T))
        else:
            w_entries.append(("attn_out_w", attn_out_w))
        f_entries.append(("attn_out_b", attn_out_b))
        w_entries.append(("out_w", out_w))
        f_entries.append(("out_b", out_b))

    wslab, wlayout = _pack_slab(w_entries, jnp.bfloat16)
    fslab, flayout = _pack_slab(f_entries, jnp.float32)
    meta = dict(D=D, Ha=Ha, H=H, W=W, ad=ad, d=d, common=common,
                att_dim=att_dim, same_depth=same_depth, fuse_final=fuse_final,
                per_node=(attention_type == "per_node"))
    return wslab, wlayout, fslab, flayout, meta


# ----------------------------------------------------------------------------
# Kernel
# ----------------------------------------------------------------------------
def _make_kernel(meta, wlayout, flayout, n_branches):
    D, Ha, W = meta["D"], meta["Ha"], meta["W"]
    ad, d, common = meta["ad"], meta["d"], meta["common"]
    same_depth, fuse_final = meta["same_depth"], meta["fuse_final"]
    per_node = meta["per_node"]
    N = n_branches
    eps = 1e-5

    def kernel(*refs):
        x_refs = refs[:N]
        w_ref, f_ref, o_ref = refs[N], refs[N + 1], refs[N + 2]
        TB = x_refs[0].shape[0]

        def wmat(name):                       # bf16 MXU operand
            r0, r, c = wlayout[name]
            return w_ref[r0:r0 + r, 0:c]

        def fvec(name):                       # f32 bias / LayerNorm / mask row
            r0, r, c = flayout[name]
            return f_ref[r0:r0 + r, 0:c]

        # Branch-major row stack (branch n -> rows [n*TB, (n+1)*TB)).  Inputs
        # are read once from HBM in their native dtype and cast to bf16 here
        # (no wrapper-side stack/cast pass).
        xf = jnp.concatenate(
            [x_refs[n][...].astype(jnp.bfloat16) for n in range(N)], axis=0)

        ln_g_pad = fvec("ln_g_pad")           # hoisted once per tile
        ln_b_pad = fvec("ln_b_pad")
        keep_h = fvec("keep_h")

        def fused_layer(inp_bf16, wname, bname):
            # one MXU push computes [attention | value]; ReLU both halves,
            # LayerNorm only the attention lanes (value lanes pass through
            # untouched via keep_h - avoids any lane re-concat).
            z = jnp.dot(inp_bf16, wmat(wname), preferred_element_type=jnp.float32)
            z = jnp.maximum(z + fvec(bname), 0.0)
            a = z[:, :Ha]
            mu = jnp.mean(a, axis=-1, keepdims=True)
            var = jnp.mean((a - mu) * (a - mu), axis=-1, keepdims=True)
            scale = ln_g_pad * lax.rsqrt(var + eps)   # gamma folded into rsqrt
            return (z - mu) * scale + ln_b_pad + z * keep_h

        ah = fused_layer(xf, "w0", "b0")
        for i in range(1, common):
            ah = fused_layer(ah.astype(jnp.bfloat16), f"wblk{i}", f"bblk{i}")

        # ----- output heads --------------------------------------------------
        if fuse_final:                        # per_element, equal depths
            zf = jnp.dot(ah.astype(jnp.bfloat16), wmat("wfin"),
                         preferred_element_type=jnp.float32) + fvec("bfin")
            att, y = zf[:, :D], zf[:, D:2 * D]
        elif same_depth:                      # per_node, equal depths
            att = jnp.sum(ah * fvec("attn_out_w_row_pad"), axis=-1,
                          keepdims=True) + fvec("attn_out_b")
            y = jnp.dot(ah[:, Ha:W].astype(jnp.bfloat16), wmat("out_w"),
                        preferred_element_type=jnp.float32) + fvec("out_b")
        else:                                 # unequal depths: finish separately
            a, h = ah[:, :Ha], ah[:, Ha:W]
            if ad > common:
                ln_g, ln_b = fvec("ln_g"), fvec("ln_b")
            for i in range(common, ad):
                a = jnp.dot(a.astype(jnp.bfloat16), wmat(f"attn_w{i}"),
                            preferred_element_type=jnp.float32) + fvec(f"attn_b{i}")
                a = jnp.maximum(a, 0.0)
                mu = jnp.mean(a, axis=-1, keepdims=True)
                var = jnp.mean((a - mu) * (a - mu), axis=-1, keepdims=True)
                a = (a - mu) * (ln_g * lax.rsqrt(var + eps)) + ln_b
            for i in range(common, d):
                h = jnp.maximum(
                    jnp.dot(h.astype(jnp.bfloat16), wmat(f"main_w{i}"),
                            preferred_element_type=jnp.float32)
                    + fvec(f"main_b{i}"), 0.0)
            if per_node:
                att = jnp.sum(a * fvec("attn_out_w_row"), axis=-1,
                              keepdims=True) + fvec("attn_out_b")
            else:
                att = jnp.dot(a.astype(jnp.bfloat16), wmat("attn_out_w"),
                              preferred_element_type=jnp.float32) + fvec("attn_out_b")
            y = jnp.dot(h.astype(jnp.bfloat16), wmat("out_w"),
                        preferred_element_type=jnp.float32) + fvec("out_b")

        # ----- softmax over branch axis + weighted sum (streaming: only one
        # (TB, D) branch slice and one exp live at a time) ---------------------
        def br(t, n):
            return t[n * TB:(n + 1) * TB, :]

        m = br(att, 0)
        for n in range(1, N):
            m = jnp.maximum(m, br(att, n))
        s = jnp.exp(br(att, 0) - m)
        for n in range(1, N):
            s = s + jnp.exp(br(att, n) - m)
        inv = pl.reciprocal(s, approx=True)
        acc = (jnp.exp(br(att, 0) - m) * inv) * br(y, 0)
        for n in range(1, N):
            acc = acc + (jnp.exp(br(att, n) - m) * inv) * br(y, n)

        # TODO(synk): for D < 128 a lane-dense packed output (128//D batch rows
        # per store row) / branch-along-lane input packing would remove the
        # masked-vst epilogue; omitted to keep the store path layout-safe.
        o_ref[...] = acc.astype(o_ref.dtype)

    return kernel


# ----------------------------------------------------------------------------
# Chip-gated tiling: big tiles + high VMEM limit on 128 MiB parts (v5e/v6e),
# conservative budget + even grid-step count on 64 MiB / 2-TC parts (v7x).
# ----------------------------------------------------------------------------
def _chip_profile():
    vmem_cap = None
    try:
        info = pltpu.get_tpu_info()
        vmem_cap = int(getattr(info, "vmem_capacity_bytes", 0)) or None
    except Exception:
        vmem_cap = None
    if vmem_cap is None:
        vmem_cap = 64 << 20                     # conservative: assume v7x-sized VMEM
    if vmem_cap >= (100 << 20):                 # v5e / v6e: 128 MiB, 1 TensorCore
        return {"vmem_budget": 80 << 20, "vmem_limit": 96 << 20,
                "target_rows": 2048, "prefer_even_grid": False}
    return {"vmem_budget": 36 << 20, "vmem_limit": 48 << 20,   # v7x: 64 MiB / 2 TC
            "target_rows": 1024, "prefer_even_grid": True}


def _choose_tb(B, N, D, W, att_dim, profile):
    per_row = 4 * N * (2 * W + att_dim + 2 * D)   # f32 z / ah / [att|y] per branch
    per_row += 2 * 2 * N * W                      # bf16 copies for the MXU
    per_row += 2 * 4 * N * D                      # double-buffered f32 input blocks
    per_row += 2 * 4 * D                          # double-buffered output block
    per_row *= 2                                  # compiler-temp headroom
    cap = max(8, profile["vmem_budget"] // max(per_row, 1))
    want = min(cap, max(8, profile["target_rows"] // max(N, 1)))
    cands = [t for t in range(8, B + 1, 8) if B % t == 0 and t <= want]
    if not cands:
        return B
    best = max(cands)
    if profile["prefer_even_grid"]:
        even = [t for t in cands if (B // t) % 2 == 0]
        if even and max(even) * 2 >= best:
            best = max(even)
    return best


# ----------------------------------------------------------------------------
# Wrapper
# ----------------------------------------------------------------------------
def simple_attention_output(branch_tensors, params, attention_type, tb=None,
                            out_dtype=jnp.float32):
    branches = list(branch_tensors.values())   # torch stacks in dict order
    N = len(branches)
    B, D = branches[0].shape
    for t in branches:
        assert t.shape == (B, D)

    wslab, wlayout, fslab, flayout, meta = _prepare_params(params, attention_type)
    assert meta["D"] == D

    profile = _chip_profile()
    if tb is None:
        tb = _choose_tb(B, N, D, meta["W"], meta["att_dim"], profile)
    assert B % tb == 0, f"tile {tb} must divide batch {B}"

    kernel = _make_kernel(meta, wlayout, flayout, N)

    # rough cost hint so XLA can schedule work around the kernel
    layer_flops = D * meta["W"] + (meta["common"] - 1) * meta["W"] ** 2
    layer_flops += (meta["ad"] - meta["common"]) * meta["Ha"] ** 2
    layer_flops += (meta["d"] - meta["common"]) * meta["H"] ** 2
    layer_flops += meta["Ha"] * meta["att_dim"] + meta["H"] * D
    flops = 2 * B * N * layer_flops + 4 * B * N * D
    out_isize = jax.dtypes.canonicalize_dtype(out_dtype).itemsize
    bytes_accessed = (N * B * D * branches[0].dtype.itemsize
                      + B * D * out_isize + wslab.size * 2 + fslab.size * 4)
    transcendentals = B * N * (2 * meta["att_dim"] + meta["ad"])

    in_specs = ([pl.BlockSpec((tb, D), lambda i: (i, 0)) for _ in range(N)]
                + [pl.BlockSpec(wslab.shape, lambda i: (0, 0)),
                   pl.BlockSpec(fslab.shape, lambda i: (0, 0))])

    return pl.pallas_call(
        kernel,
        out_shape=jax.ShapeDtypeStruct((B, D), out_dtype),
        grid=(B // tb,),
        in_specs=in_specs,
        out_specs=pl.BlockSpec((tb, D), lambda i: (i, 0)),
        compiler_params=pltpu.CompilerParams(
            dimension_semantics=("parallel",),
            vmem_limit_bytes=profile["vmem_limit"],
        ),
        cost_estimate=pl.CostEstimate(
            flops=int(flops),
            transcendentals=int(transcendentals),
            bytes_accessed=int(bytes_accessed)),
    )(*branches, wslab, fslab)


# ----------------------------------------------------------------------------
# Deterministic nn.Linear-style init (weights (in, out); bias (1, out)).
# ----------------------------------------------------------------------------
def init_params(key, dim, attention_depth, attention_hidden_dim, depth, hidden_dim,
                attention_type):
    def linear(k, fan_in, fan_out):
        kw, kb = jax.random.split(k)
        bound = 1.0 / math.sqrt(fan_in)
        w = jax.random.uniform(kw, (fan_in, fan_out), jnp.float32, -bound, bound)
        b = jax.random.uniform(kb, (1, fan_out), jnp.float32, -bound, bound)
        return w, b

    keys = jax.random.split(key, attention_depth + depth + 2)
    ki = 0
    attn_ws, attn_bs = [], []
    in_dim = dim
    for _ in range(attention_depth):
        w, b = linear(keys[ki], in_dim, attention_hidden_dim); ki += 1
        attn_ws.append(w); attn_bs.append(b)
        in_dim = attention_hidden_dim

    attn_out_dim = 1 if attention_type == "per_node" else dim
    attn_out_w, attn_out_b = linear(keys[ki], attention_hidden_dim, attn_out_dim); ki += 1

    main_ws, main_bs = [], []
    in_dim = dim
    for _ in range(depth):
        w, b = linear(keys[ki], in_dim, hidden_dim); ki += 1
        main_ws.append(w); main_bs.append(b)
        in_dim = hidden_dim
    out_w, out_b = linear(keys[ki], hidden_dim, dim)

    return {
        "attn_ws": attn_ws, "attn_bs": attn_bs,
        "ln_g": jnp.ones((1, attention_hidden_dim), jnp.float32),
        "ln_b": jnp.zeros((1, attention_hidden_dim), jnp.float32),
        "attn_out_w": attn_out_w, "attn_out_b": attn_out_b,
        "main_ws": main_ws, "main_bs": main_bs,
        "out_w": out_w, "out_b": out_b,
    }


def reference(x_nbd, params):
    """Pure-JAX f32 reference (x is (N, B, D); softmax over branch axis 0)."""
    a = x_nbd
    for w, b in zip(params["attn_ws"], params["attn_bs"]):
        a = jnp.maximum(a @ w + b, 0.0)
        mu = a.mean(-1, keepdims=True)
        var = ((a - mu) ** 2).mean(-1, keepdims=True)
        a = (a - mu) / jnp.sqrt(var + 1e-5) * params["ln_g"] + params["ln_b"]
    att = a @ params["attn_out_w"] + params["attn_out_b"]
    att = jax.nn.softmax(att, axis=0)
    h = x_nbd
    for w, b in zip(params["main_ws"], params["main_bs"]):
        h = jnp.maximum(h @ w + b, 0.0)
    y = h @ params["out_w"] + params["out_b"]
    return jnp.sum(att * y, axis=0)


if __name__ == "__main__":
    attention_hidden_dim = 32
    hidden_dim = 32
    B, N, D = 16, 4, 32

    key = jax.random.PRNGKey(0)
    k_p, k_x = jax.random.split(key)
    branch_keys = jax.random.split(k_x, N)
    branch_tensors = {i: jax.random.normal(branch_keys[i], (B, D), jnp.float32)
                      for i in range(N)}

    q = lambda t: t.astype(jnp.bfloat16).astype(jnp.float32)  # kernel precision

    configs = [
        ("per_node", 2, 2),       # fused hidden + VPU attention head
        ("per_element", 2, 2),    # fused hidden + fused final block-diag head
        ("per_element", 3, 2),    # leftover attention layers (unfused tail)
        ("per_node", 2, 3),       # leftover value layers (unfused tail)
    ]
    for attention_type, attention_depth, depth in configs:
        params = init_params(k_p, D, attention_depth, attention_hidden_dim, depth,
                             hidden_dim, attention_type)

        out = simple_attention_output(branch_tensors, params, attention_type)
        out = jax.block_until_ready(out)

        # Reference in f32 on the same bf16-quantized inputs/params; loose
        # tolerance covers the kernel's bf16 intermediate casts + approx recip.
        x_q = q(jnp.stack(list(branch_tensors.values()), axis=0))
        params_q = jax.tree_util.tree_map(q, params)
        ref = reference(x_q, params_q)

        assert out.shape == (B, D)
        assert jnp.allclose(out, ref, atol=5e-2, rtol=5e-2), \
            f"mismatch vs reference ({attention_type}, ad={attention_depth}, d={depth})"

    print("KERNEL_OK")
</pallas_src>

<mosaic_0001>
module attributes {stable_mosaic.version = 11 : i64} {
  func.func @kernel(%arg0: i32, %arg1: memref<8x32xf32, #tpu.memory_space<vmem>>, %arg2: memref<8x32xf32, #tpu.memory_space<vmem>>, %arg3: memref<8x32xf32, #tpu.memory_space<vmem>>, %arg4: memref<8x32xf32, #tpu.memory_space<vmem>>, %arg5: memref<128x64xbf16, #tpu.memory_space<vmem>>, %arg6: memref<64x64xf32, #tpu.memory_space<vmem>>, %arg7: memref<8x32xf32, #tpu.memory_space<vmem>>) attributes {dimension_semantics = [#tpu.dimension_semantics<parallel>], iteration_bounds = array<i64: 2>, scalar_prefetch = 0 : i64, scratch_operands = 0 : i64, tpu.core_type = #tpu.core_type<tc>, window_params = [{transform_indices = @transform_0, window_bounds = array<i64: 8, 32>}, {transform_indices = @transform_1, window_bounds = array<i64: 8, 32>}, {transform_indices = @transform_2, window_bounds = array<i64: 8, 32>}, {transform_indices = @transform_3, window_bounds = array<i64: 8, 32>}, {pipeline_mode = #tpu.pipeline_mode<synchronous>, transform_indices = @transform_4, window_bounds = array<i64: 128, 64>}, {pipeline_mode = #tpu.pipeline_mode<synchronous>, transform_indices = @transform_5, window_bounds = array<i64: 64, 64>}, {transform_indices = @transform_6, window_bounds = array<i64: 8, 32>}]} {
    %c0 = arith.constant 0 : index
    %c0_0 = arith.constant 0 : index
    %0 = vector.load %arg1[%c0, %c0_0] : memref<8x32xf32, #tpu.memory_space<vmem>>, vector<8x32xf32>
    %1 = arith.truncf %0 : vector<8x32xf32> to vector<8x32xbf16>
    %c0_1 = arith.constant 0 : index
    %c0_2 = arith.constant 0 : index
    %2 = vector.load %arg2[%c0_1, %c0_2] : memref<8x32xf32, #tpu.memory_space<vmem>>, vector<8x32xf32>
    %3 = arith.truncf %2 : vector<8x32xf32> to vector<8x32xbf16>
    %c0_3 = arith.constant 0 : index
    %c0_4 = arith.constant 0 : index
    %4 = vector.load %arg3[%c0_3, %c0_4] : memref<8x32xf32, #tpu.memory_space<vmem>>, vector<8x32xf32>
    %5 = arith.truncf %4 : vector<8x32xf32> to vector<8x32xbf16>
    %c0_5 = arith.constant 0 : index
    %c0_6 = arith.constant 0 : index
    %6 = vector.load %arg4[%c0_5, %c0_6] : memref<8x32xf32, #tpu.memory_space<vmem>>, vector<8x32xf32>
    %7 = arith.truncf %6 : vector<8x32xf32> to vector<8x32xbf16>
    %8 = tpu.concatenate %1, %3, %5, %7 in 0 : vector<8x32xbf16>, vector<8x32xbf16>, vector<8x32xbf16>, vector<8x32xbf16> -> vector<32x32xbf16>
    %c16 = arith.constant 16 : index
    %c0_7 = arith.constant 0 : index
    %9 = vector.load %arg6[%c16, %c0_7] : memref<64x64xf32, #tpu.memory_space<vmem>>, vector<1x64xf32>
    %c24 = arith.constant 24 : index
    %c0_8 = arith.constant 0 : index
    %10 = vector.load %arg6[%c24, %c0_8] : memref<64x64xf32, #tpu.memory_space<vmem>>, vector<1x64xf32>
    %c32 = arith.constant 32 : index
    %c0_9 = arith.constant 0 : index
    %11 = vector.load %arg6[%c32, %c0_9] : memref<64x64xf32, #tpu.memory_space<vmem>>, vector<1x64xf32>
    %c0_10 = arith.constant 0 : index
    %c0_11 = arith.constant 0 : index
    %12 = vector.load %arg5[%c0_10, %c0_11] : memref<128x64xbf16, #tpu.memory_space<vmem>>, vector<32x64xbf16>
    %cst = arith.constant dense<0.000000e+00> : vector<32x64xf32>
    %13 = tpu.matmul %8, %12, %cst {dimension_numbers = #tpu.dot_dimension_numbers<[1], [0], [0], [1], [0, 0, 1, 1], [], []>} : vector<32x32xbf16>, vector<32x64xbf16>, vector<32x64xf32> -> vector<32x64xf32>
    %c0_12 = arith.constant 0 : index
    %c0_13 = arith.constant 0 : index
    %14 = vector.load %arg6[%c0_12, %c0_13] : memref<64x64xf32, #tpu.memory_space<vmem>>, vector<1x64xf32>
    %15 = vector.broadcast %14 : vector<1x64xf32> to vector<32x64xf32>
    %16 = arith.addf %13, %15 : vector<32x64xf32>
    %cst_14 = arith.constant 0.000000e+00 : f32
    %17 = vector.broadcast %cst_14 : f32 to vector<32x64xf32>
    %18 = arith.maximumf %16, %17 : vector<32x64xf32>
    %19 = vector.extract_strided_slice %18 {offsets = [0, 0], sizes = [32, 32], strides = [1, 1]} : vector<32x64xf32> to vector<32x32xf32>
    %cst_15 = arith.constant dense<0.000000e+00> : vector<32xf32>
    %20 = vector.multi_reduction <add>, %19, %cst_15 [1] : vector<32x32xf32> to vector<32xf32>
    %21 = vector.shape_cast %20 : vector<32xf32> to vector<32x1xf32>
    %cst_16 = arith.constant 3.200000e+01 : f32
    %22 = vector.broadcast %cst_16 : f32 to vector<32x1xf32>
    %23 = arith.divf %21, %22 : vector<32x1xf32>
    %24 = vector.broadcast %23 : vector<32x1xf32> to vector<32x32xf32>
    %25 = arith.subf %19, %24 : vector<32x32xf32>
    %26 = vector.broadcast %23 : vector<32x1xf32> to vector<32x32xf32>
    %27 = arith.subf %19, %26 : vector<32x32xf32>
    %28 = arith.mulf %25, %27 : vector<32x32xf32>
    %cst_17 = arith.constant dense<0.000000e+00> : vector<32xf32>
    %29 = vector.multi_reduction <add>, %28, %cst_17 [1] : vector<32x32xf32> to vector<32xf32>
    %30 = vector.shape_cast %29 : vector<32xf32> to vector<32x1xf32>
    %cst_18 = arith.constant 3.200000e+01 : f32
    %31 = vector.broadcast %cst_18 : f32 to vector<32x1xf32>
    %32 = arith.divf %30, %31 : vector<32x1xf32>
    %cst_19 = arith.constant 9.99999974E-6 : f32
    %33 = vector.broadcast %cst_19 : f32 to vector<32x1xf32>
    %34 = arith.addf %32, %33 : vector<32x1xf32>
    %35 = math.rsqrt %34 : vector<32x1xf32>
    %36 = vector.broadcast %9 : vector<1x64xf32> to vector<32x64xf32>
    %37 = vector.broadcast %35 : vector<32x1xf32> to vector<32x64xf32>
    %38 = arith.mulf %36, %37 : vector<32x64xf32>
    %39 = vector.broadcast %23 : vector<32x1xf32> to vector<32x64xf32>
    %40 = arith.subf %18, %39 : vector<32x64xf32>
    %41 = arith.mulf %40, %38 : vector<32x64xf32>
    %42 = vector.broadcast %10 : vector<1x64xf32> to vector<32x64xf32>
    %43 = arith.addf %41, %42 : vector<32x64xf32>
    %44 = vector.broadcast %11 : vector<1x64xf32> to vector<32x64xf32>
    %45 = arith.mulf %18, %44 : vector<32x64xf32>
    %46 = arith.addf %43, %45 : vector<32x64xf32>
    %47 = arith.truncf %46 : vector<32x64xf32> to vector<32x64xbf16>
    %c32_20 = arith.constant 32 : index
    %c0_21 = arith.constant 0 : index
    %48 = vector.load %arg5[%c32_20, %c0_21] : memref<128x64xbf16, #tpu.memory_space<vmem>>, vector<64x64xbf16>
    %cst_22 = arith.constant dense<0.000000e+00> : vector<32x64xf32>
    %49 = tpu.matmul %47, %48, %cst_22 {dimension_numbers = #tpu.dot_dimension_numbers<[1], [0], [0], [1], [0, 0, 1, 1], [], []>} : vector<32x64xbf16>, vector<64x64xbf16>, vector<32x64xf32> -> vector<32x64xf32>
    %c8 = arith.constant 8 : index
    %c0_23 = arith.constant 0 : index
    %50 = vector.load %arg6[%c8, %c0_23] : memref<64x64xf32, #tpu.memory_space<vmem>>, vector<1x64xf32>
    %51 = vector.broadcast %50 : vector<1x64xf32> to vector<32x64xf32>
    %52 = arith.addf %49, %51 : vector<32x64xf32>
    %cst_24 = arith.constant 0.000000e+00 : f32
    %53 = vector.broadcast %cst_24 : f32 to vector<32x64xf32>
    %54 = arith.maximumf %52, %53 : vector<32x64xf32>
    %55 = vector.extract_strided_slice %54 {offsets = [0, 0], sizes = [32, 32], strides = [1, 1]} : vector<32x64xf32> to vector<32x32xf32>
    %cst_25 = arith.constant dense<0.000000e+00> : vector<32xf32>
    %56 = vector.multi_reduction <add>, %55, %cst_25 [1] : vector<32x32xf32> to vector<32xf32>
    %57 = vector.shape_cast %56 : vector<32xf32> to vector<32x1xf32>
    %cst_26 = arith.constant 3.200000e+01 : f32
    %58 = vector.broadcast %cst_26 : f32 to vector<32x1xf32>
    %59 = arith.divf %57, %58 : vector<32x1xf32>
    %60 = vector.broadcast %59 : vector<32x1xf32> to vector<32x32xf32>
    %61 = arith.subf %55, %60 : vector<32x32xf32>
    %62 = vector.broadcast %59 : vector<32x1xf32> to vector<32x32xf32>
    %63 = arith.subf %55, %62 : vector<32x32xf32>
    %64 = arith.mulf %61, %63 : vector<32x32xf32>
    %cst_27 = arith.constant dense<0.000000e+00> : vector<32xf32>
    %65 = vector.multi_reduction <add>, %64, %cst_27 [1] : vector<32x32xf32> to vector<32xf32>
    %66 = vector.shape_cast %65 : vector<32xf32> to vector<32x1xf32>
    %cst_28 = arith.constant 3.200000e+01 : f32
    %67 = vector.broadcast %cst_28 : f32 to vector<32x1xf32>
    %68 = arith.divf %66, %67 : vector<32x1xf32>
    %cst_29 = arith.constant 9.99999974E-6 : f32
    %69 = vector.broadcast %cst_29 : f32 to vector<32x1xf32>
    %70 = arith.addf %68, %69 : vector<32x1xf32>
    %71 = math.rsqrt %70 : vector<32x1xf32>
    %72 = vector.broadcast %9 : vector<1x64xf32> to vector<32x64xf32>
    %73 = vector.broadcast %71 : vector<32x1xf32> to vector<32x64xf32>
    %74 = arith.mulf %72, %73 : vector<32x64xf32>
    %75 = vector.broadcast %59 : vector<32x1xf32> to vector<32x64xf32>
    %76 = arith.subf %54, %75 : vector<32x64xf32>
    %77 = arith.mulf %76, %74 : vector<32x64xf32>
    %78 = vector.broadcast %10 : vector<1x64xf32> to vector<32x64xf32>
    %79 = arith.addf %77, %78 : vector<32x64xf32>
    %80 = vector.broadcast %11 : vector<1x64xf32> to vector<32x64xf32>
    %81 = arith.mulf %54, %80 : vector<32x64xf32>
    %82 = arith.addf %79, %81 : vector<32x64xf32>
    %c40 = arith.constant 40 : index
    %c0_30 = arith.constant 0 : index
    %83 = vector.load %arg6[%c40, %c0_30] : memref<64x64xf32, #tpu.memory_space<vmem>>, vector<1x64xf32>
    %84 = vector.broadcast %83 : vector<1x64xf32> to vector<32x64xf32>
    %85 = arith.mulf %82, %84 : vector<32x64xf32>
    %cst_31 = arith.constant dense<0.000000e+00> : vector<32xf32>
    %86 = vector.multi_reduction <add>, %85, %cst_31 [1] : vector<32x64xf32> to vector<32xf32>
    %87 = vector.shape_cast %86 : vector<32xf32> to vector<32x1xf32>
    %c48 = arith.constant 48 : index
    %c0_32 = arith.constant 0 : index
    %88 = vector.load %arg6[%c48, %c0_32] : memref<64x64xf32, #tpu.memory_space<vmem>>, vector<1x1xf32>
    %89 = vector.broadcast %88 : vector<1x1xf32> to vector<32x1xf32>
    %90 = arith.addf %87, %89 : vector<32x1xf32>
    %91 = vector.extract_strided_slice %82 {offsets = [0, 32], sizes = [32, 32], strides = [1, 1]} : vector<32x64xf32> to vector<32x32xf32>
    %92 = arith.truncf %91 : vector<32x32xf32> to vector<32x32xbf16>
    %c96 = arith.constant 96 : index
    %c0_33 = arith.constant 0 : index
    %93 = vector.load %arg5[%c96, %c0_33] : memref<128x64xbf16, #tpu.memory_space<vmem>>, vector<32x32xbf16>
    %cst_34 = arith.constant dense<0.000000e+00> : vector<32x32xf32>
    %94 = tpu.matmul %92, %93, %cst_34 {dimension_numbers = #tpu.dot_dimension_numbers<[1], [0], [0], [1], [0, 0, 1, 1], [], []>} : vector<32x32xbf16>, vector<32x32xbf16>, vector<32x32xf32> -> vector<32x32xf32>
    %c56 = arith.constant 56 : index
    %c0_35 = arith.constant 0 : index
    %95 = vector.load %arg6[%c56, %c0_35] : memref<64x64xf32, #tpu.memory_space<vmem>>, vector<1x32xf32>
    %96 = vector.broadcast %95 : vector<1x32xf32> to vector<32x32xf32>
    %97 = arith.addf %94, %96 : vector<32x32xf32>
    %98 = vector.extract_strided_slice %90 {offsets = [0, 0], sizes = [8, 1], strides = [1, 1]} : vector<32x1xf32> to vector<8x1xf32>
    %99 = vector.extract_strided_slice %90 {offsets = [8, 0], sizes = [8, 1], strides = [1, 1]} : vector<32x1xf32> to vector<8x1xf32>
    %100 = arith.maximumf %98, %99 : vector<8x1xf32>
    %101 = vector.extract_strided_slice %90 {offsets = [16, 0], sizes = [8, 1], strides = [1, 1]} : vector<32x1xf32> to vector<8x1xf32>
    %102 = arith.maximumf %100, %101 : vector<8x1xf32>
    %103 = vector.extract_strided_slice %90 {offsets = [24, 0], sizes = [8, 1], strides = [1, 1]} : vector<32x1xf32> to vector<8x1xf32>
    %104 = arith.maximumf %102, %103 : vector<8x1xf32>
    %105 = vector.extract_strided_slice %90 {offsets = [0, 0], sizes = [8, 1], strides = [1, 1]} : vector<32x1xf32> to vector<8x1xf32>
    %106 = arith.subf %105, %104 : vector<8x1xf32>
    %107 = math.exp %106 : vector<8x1xf32>
    %108 = vector.extract_strided_slice %90 {offsets = [8, 0], sizes = [8, 1], strides = [1, 1]} : vector<32x1xf32> to vector<8x1xf32>
    %109 = arith.subf %108, %104 : vector<8x1xf32>
    %110 = math.exp %109 : vector<8x1xf32>
    %111 = arith.addf %107, %110 : vector<8x1xf32>
    %112 = vector.extract_strided_slice %90 {offsets = [16, 0], sizes = [8, 1], strides = [1, 1]} : vector<32x1xf32> to vector<8x1xf32>
    %113 = arith.subf %112, %104 : vector<8x1xf32>
    %114 = math.exp %113 : vector<8x1xf32>
    %115 = arith.addf %111, %114 : vector<8x1xf32>
    %116 = vector.extract_strided_slice %90 {offsets = [24, 0], sizes = [8, 1], strides = [1, 1]} : vector<32x1xf32> to vector<8x1xf32>
    %117 = arith.subf %116, %104 : vector<8x1xf32>
    %118 = math.exp %117 : vector<8x1xf32>
    %119 = arith.addf %115, %118 : vector<8x1xf32>
    %120 = tpu.reciprocal %119 {approx = true} : vector<8x1xf32> -> vector<8x1xf32>
    %121 = vector.extract_strided_slice %90 {offsets = [0, 0], sizes = [8, 1], strides = [1, 1]} : vector<32x1xf32> to vector<8x1xf32>
    %122 = arith.subf %121, %104 : vector<8x1xf32>
    %123 = math.exp %122 : vector<8x1xf32>
    %124 = arith.mulf %123, %120 : vector<8x1xf32>
    %125 = vector.extract_strided_slice %97 {offsets = [0, 0], sizes = [8, 32], strides = [1, 1]} : vector<32x32xf32> to vector<8x32xf32>
    %126 = vector.broadcast %124 : vector<8x1xf32> to vector<8x32xf32>
    %127 = arith.mulf %126, %125 : vector<8x32xf32>
    %128 = vector.extract_strided_slice %90 {offsets = [8, 0], sizes = [8, 1], strides = [1, 1]} : vector<32x1xf32> to vector<8x1xf32>
    %129 = arith.subf %128, %104 : vector<8x1xf32>
    %130 = math.exp %129 : vector<8x1xf32>
    %131 = arith.mulf %130, %120 : vector<8x1xf32>
    %132 = vector.extract_strided_slice %97 {offsets = [8, 0], sizes = [8, 32], strides = [1, 1]} : vector<32x32xf32> to vector<8x32xf32>
    %133 = vector.broadcast %131 : vector<8x1xf32> to vector<8x32xf32>
    %134 = arith.mulf %133, %132 : vector<8x32xf32>
    %135 = arith.addf %127, %134 : vector<8x32xf32>
    %136 = vector.extract_strided_slice %90 {offsets = [16, 0], sizes = [8, 1], strides = [1, 1]} : vector<32x1xf32> to vector<8x1xf32>
    %137 = arith.subf %136, %104 : vector<8x1xf32>
    %138 = math.exp %137 : vector<8x1xf32>
    %139 = arith.mulf %138, %120 : vector<8x1xf32>
    %140 = vector.extract_strided_slice %97 {offsets = [16, 0], sizes = [8, 32], strides = [1, 1]} : vector<32x32xf32> to vector<8x32xf32>
    %141 = vector.broadcast %139 : vector<8x1xf32> to vector<8x32xf32>
    %142 = arith.mulf %141, %140 : vector<8x32xf32>
    %143 = arith.addf %135, %142 : vector<8x32xf32>
    %144 = vector.extract_strided_slice %90 {offsets = [24, 0], sizes = [8, 1], strides = [1, 1]} : vector<32x1xf32> to vector<8x1xf32>
    %145 = arith.subf %144, %104 : vector<8x1xf32>
    %146 = math.exp %145 : vector<8x1xf32>
    %147 = arith.mulf %146, %120 : vector<8x1xf32>
    %148 = vector.extract_strided_slice %97 {offsets = [24, 0], sizes = [8, 32], strides = [1, 1]} : vector<32x32xf32> to vector<8x32xf32>
    %149 = vector.broadcast %147 : vector<8x1xf32> to vector<8x32xf32>
    %150 = arith.mulf %149, %148 : vector<8x32xf32>
    %151 = arith.addf %143, %150 : vector<8x32xf32>
    %c0_36 = arith.constant 0 : index
    %c0_37 = arith.constant 0 : index
    %152 = vector.load %arg7[%c0_36, %c0_37] : memref<8x32xf32, #tpu.memory_space<vmem>>, vector<8x32xf32>
    tpu.vector_store %arg7[%c0_36, %c0_37], %151 {strides = array<i32>} : memref<8x32xf32, #tpu.memory_space<vmem>>, vector<8x32xf32>,
    return
  }
  func.func @transform_0(%arg0: i32) -> (i32, i32) {
    %c0_i32 = arith.constant 0 : i32
    %c0_i32_0 = arith.constant 0 : i32
    return %arg0, %c0_i32 : i32, i32
  }
  func.func @transform_1(%arg0: i32) -> (i32, i32) {
    %c0_i32 = arith.constant 0 : i32
    %c0_i32_0 = arith.constant 0 : i32
    return %arg0, %c0_i32 : i32, i32
  }
  func.func @transform_2(%arg0: i32) -> (i32, i32) {
    %c0_i32 = arith.constant 0 : i32
    %c0_i32_0 = arith.constant 0 : i32
    return %arg0, %c0_i32 : i32, i32
  }
  func.func @transform_3(%arg0: i32) -> (i32, i32) {
    %c0_i32 = arith.constant 0 : i32
    %c0_i32_0 = arith.constant 0 : i32
    return %arg0, %c0_i32 : i32, i32
  }
  func.func @transform_4(%arg0: i32) -> (i32, i32) {
    %c0_i32 = arith.constant 0 : i32
    %c0_i32_0 = arith.constant 0 : i32
    %c0_i32_1 = arith.constant 0 : i32
    return %c0_i32, %c0_i32_0 : i32, i32
  }
  func.func @transform_5(%arg0: i32) -> (i32, i32) {
    %c0_i32 = arith.constant 0 : i32
    %c0_i32_0 = arith.constant 0 : i32
    %c0_i32_1 = arith.constant 0 : i32
    return %c0_i32, %c0_i32_0 : i32, i32
  }
  func.func @transform_6(%arg0: i32) -> (i32, i32) {
    %c0_i32 = arith.constant 0 : i32
    %c0_i32_0 = arith.constant 0 : i32
    return %arg0, %c0_i32 : i32, i32
  }
}

</mosaic_0001>

<llo_original>
// kernel: tpu_custom_call.1
$region0: #{tpu_custom_call.1}
  #allocation0 [shape = 'u32[]', space=smem, size = 0x4, offset = 0x4, fixed_abs, tag = 'smem constant byte address 0x4 - core index']
  #allocation1 [shape = 'u32[144,128]{1,0:T(1,128)}', space=vmem, size = 0x12000, scoped, tag = 'internal scratch']
  %s0 = inlined_call_operand.vmem [shape: f32[16,32], index: 0, kind: input, shape index: {}]
  %s1 = inlined_call_operand.vmem [shape: f32[16,32], index: 1, kind: input, shape index: {}]
  %s2 = inlined_call_operand.hbm [shape: f32[16,32], index: 2, kind: input, shape index: {}]
  %s3 = inlined_call_operand.hbm [shape: f32[16,32], index: 3, kind: input, shape index: {}]
  %s4 = inlined_call_operand.vmem [shape: bf16[128,64], index: 4, kind: input, shape index: {}]
  %s5 = inlined_call_operand.vmem [shape: f32[64,64], index: 5, kind: input, shape index: {}]
  %s6 = inlined_call_operand.hbm [shape: f32[16,32], index: 6, kind: output, shape index: {}]
  %s7 = sld [smem:[#allocation0]]
  $region65: #{tpu_custom_call.1} parent=0
    _
  %s9 = ssub.s32 1, %s7
  %s10 = scalar_select 0, %s9, %s7
  $region1: #{tpu_custom_call.1} parent=0
    #allocation2 [shape = 'u8[8192]{0}', space=vmem, size = 0x2000, scoped, tag = 'input window, operand 2']
    #allocation3 [shape = 's32[2]{0}', space=sflag, size = 0x8, scoped, tag = 'scoped memory for tpu_custom_call.1']
    #allocation4 [shape = 's32[2]{0}', space=sflag, size = 0x8, scoped, tag = 'scoped memory for tpu_custom_call.1']
    #allocation5 [shape = 'u8[8192]{0}', space=vmem, size = 0x2000, scoped, tag = 'input window, operand 3']
    #allocation6 [shape = 's32[2]{0}', space=sflag, size = 0x8, scoped, tag = 'scoped memory for tpu_custom_call.1']
    #allocation7 [shape = 'u8[8192]{0}', space=vmem, size = 0x2000, scoped, tag = 'output window, operand 0']
    %11 = vsyncpa [#allocation3], 0
    %s12 = scalar_lea.sflag [#allocation3], 1
    %13 = vsyncpa %s12, 0
    %14 = vsyncpa [#allocation6], 0
    %s15 = scalar_lea.sflag [#allocation6], 1
    %16 = vsyncpa %s15, 0
    %17 = vsyncpa [#allocation4], 0
    %s18 = scalar_lea.sflag [#allocation4], 1
    %19 = vsyncpa %s18, 0
    loop: start=0, step=1, limit=4
    $region2: #{tpu_custom_call.1} parent=1 // loop_pre_header
      _
    $region3: #{tpu_custom_call.1} parent=1 // loop_header
      %s21 = sphi 0, %s25
      %p22 = scmp.ge.s32.totalorder %s21, 4
      %s31 = sphi 0, %s33
      %s34 = sphi 0, %s31
      %s35 = sphi 0, %s34
      %s51 = sphi 0, %s35
      %s57 = sphi 0, %s59
      %s60 = sphi 0, %s57
      %s61 = sphi 0, %s60
      %s77 = sphi 0, %s61
      %s83 = sphi 0, %s85
      %s86 = sphi 0, %s83
      %s87 = sphi 0, %s86
      %s103 = sphi 0, %s87
      %s109 = sphi 0, %s111
      %s112 = sphi 0, %s109
      %s113 = sphi 0, %s112
      %s129 = sphi 0, %s113
      %s133 = sphi 0, %s133
      %s135 = sphi 0, %s133
      %s136 = sphi 0, %s135
      %s150 = sphi 0, %s136
      %s154 = sphi 0, %s154
      %s156 = sphi 0, %s154
      %s157 = sphi 0, %s156
      %s171 = sphi 0, %s157
      %s177 = sphi 0, %s179
      %s180 = sphi 0, %s177
      %s181 = sphi 0, %s180
      %s197 = sphi 0, %s181
    $region4: #{tpu_custom_call.1} parent=1 // loop_header_branch
      %24 = sbr.rel (%p22) target = $region8
    $region5: #{tpu_custom_call.1} parent=1 // loop_body
      %s26 = ssub.s32 %s21, 1
      %s27 = ssub.s32 %s21, 2
      %s28 = sadd.s32 %s21, 1
      %s29 = ssub.s32 %s21, %s28
      %p30 = scmp.eq.s32.totalorder %s29, 0
      %s32 = sadd.s32 %s31, 1
      %s33 = scalar_select %p30, %s31, %s32
      %p36 = pneg %p30
      %p37 = scmp.eq.s32.totalorder %s21, 1
      %p38 = por %p36, %p37
      %p39 = scmp.ne.s32.totalorder %s31, %s34
      %p40 = scmp.eq.s32.totalorder %s21, 0
      %p41 = por %p39, %p40
      %p42 = scmp.ne.s32.totalorder %s31, %s34
      %p43 = scmp.eq.s32.totalorder %s26, 1
      %p44 = por %p42, %p43
      %p45 = scmp.ne.s32.totalorder %s34, %s35
      %p46 = scmp.eq.s32.totalorder %s26, 0
      %p47 = por %p45, %p46
      %p48 = scmp.ne.s32.totalorder %s34, %s35
      %p49 = scmp.eq.s32.totalorder %s27, 1
      %p50 = por %p48, %p49
      %p52 = scmp.ne.s32.totalorder %s35, %s51
      %p53 = scmp.eq.s32.totalorder %s27, 0
      %p54 = por %p52, %p53
      %s55 = ssub.s32 %s21, %s28
      %p56 = scmp.eq.s32.totalorder %s55, 0
      %s58 = sadd.s32 %s57, 1
      %s59 = scalar_select %p56, %s57, %s58
      %p62 = pneg %p56
      %p63 = scmp.eq.s32.totalorder %s21, 1
      %p64 = por %p62, %p63
      %p65 = scmp.ne.s32.totalorder %s57, %s60
      %p66 = scmp.eq.s32.totalorder %s21, 0
      %p67 = por %p65, %p66
      %p68 = scmp.ne.s32.totalorder %s57, %s60
      %p69 = scmp.eq.s32.totalorder %s26, 1
      %p70 = por %p68, %p69
      %p71 = scmp.ne.s32.totalorder %s60, %s61
      %p72 = scmp.eq.s32.totalorder %s26, 0
      %p73 = por %p71, %p72
      %p74 = scmp.ne.s32.totalorder %s60, %s61
      %p75 = scmp.eq.s32.totalorder %s27, 1
      %p76 = por %p74, %p75
      %p78 = scmp.ne.s32.totalorder %s61, %s77
      %p79 = scmp.eq.s32.totalorder %s27, 0
      %p80 = por %p78, %p79
      %s81 = ssub.s32 %s21, %s28
      %p82 = scmp.eq.s32.totalorder %s81, 0
      %s84 = sadd.s32 %s83, 1
      %s85 = scalar_select %p82, %s83, %s84
      %p88 = pneg %p82
      %p89 = scmp.eq.s32.totalorder %s21, 1
      %p90 = por %p88, %p89
      %p91 = scmp.ne.s32.totalorder %s83, %s86
      %p92 = scmp.eq.s32.totalorder %s21, 0
      %p93 = por %p91, %p92
      %p94 = scmp.ne.s32.totalorder %s83, %s86
      %p95 = scmp.eq.s32.totalorder %s26, 1
      %p96 = por %p94, %p95
      %p97 = scmp.ne.s32.totalorder %s86, %s87
      %p98 = scmp.eq.s32.totalorder %s26, 0
      %p99 = por %p97, %p98
      %p100 = scmp.ne.s32.totalorder %s86, %s87
      %p101 = scmp.eq.s32.totalorder %s27, 1
      %p102 = por %p100, %p101
      %p104 = scmp.ne.s32.totalorder %s87, %s103
      %p105 = scmp.eq.s32.totalorder %s27, 0
      %p106 = por %p104, %p105
      %s107 = ssub.s32 %s21, %s28
      %p108 = scmp.eq.s32.totalorder %s107, 0
      %s110 = sadd.s32 %s109, 1
      %s111 = scalar_select %p108, %s109, %s110
      %p114 = pneg %p108
      %p115 = scmp.eq.s32.totalorder %s21, 1
      %p116 = por %p114, %p115
      %p117 = scmp.ne.s32.totalorder %s109, %s112
      %p118 = scmp.eq.s32.totalorder %s21, 0
      %p119 = por %p117, %p118
      %p120 = scmp.ne.s32.totalorder %s109, %s112
      %p121 = scmp.eq.s32.totalorder %s26, 1
      %p122 = por %p120, %p121
      %p123 = scmp.ne.s32.totalorder %s112, %s113
      %p124 = scmp.eq.s32.totalorder %s26, 0
      %p125 = por %p123, %p124
      %p126 = scmp.ne.s32.totalorder %s112, %s113
      %p127 = scmp.eq.s32.totalorder %s27, 1
      %p128 = por %p126, %p127
      %p130 = scmp.ne.s32.totalorder %s113, %s129
      %p131 = scmp.eq.s32.totalorder %s27, 0
      %p132 = por %p130, %p131
      %s134 = sadd.s32 %s133, 1
      %p137 = scmp.eq.s32.totalorder %s21, 1
      %p138 = scmp.ne.s32.totalorder %s133, %s135
      %p139 = scmp.eq.s32.totalorder %s21, 0
      %p140 = por %p138, %p139
      %p141 = scmp.ne.s32.totalorder %s133, %s135
      %p142 = scmp.eq.s32.totalorder %s26, 1
      %p143 = por %p141, %p142
      %p144 = scmp.ne.s32.totalorder %s135, %s136
      %p145 = scmp.eq.s32.totalorder %s26, 0
      %p146 = por %p144, %p145
      %p147 = scmp.ne.s32.totalorder %s135, %s136
      %p148 = scmp.eq.s32.totalorder %s27, 1
      %p149 = por %p147, %p148
      %p151 = scmp.ne.s32.totalorder %s136, %s150
      %p152 = scmp.eq.s32.totalorder %s27, 0
      %p153 = por %p151, %p152
      %s155 = sadd.s32 %s154, 1
      %p158 = scmp.eq.s32.totalorder %s21, 1
      %p159 = scmp.ne.s32.totalorder %s154, %s156
      %p160 = scmp.eq.s32.totalorder %s21, 0
      %p161 = por %p159, %p160
      %p162 = scmp.ne.s32.totalorder %s154, %s156
      %p163 = scmp.eq.s32.totalorder %s26, 1
      %p164 = por %p162, %p163
      %p165 = scmp.ne.s32.totalorder %s156, %s157
      %p166 = scmp.eq.s32.totalorder %s26, 0
      %p167 = por %p165, %p166
      %p168 = scmp.ne.s32.totalorder %s156, %s157
      %p169 = scmp.eq.s32.totalorder %s27, 1
      %p170 = por %p168, %p169
      %p172 = scmp.ne.s32.totalorder %s157, %s171
      %p173 = scmp.eq.s32.totalorder %s27, 0
      %p174 = por %p172, %p173
      %s175 = ssub.s32 %s21, %s28
      %p176 = scmp.eq.s32.totalorder %s175, 0
      %s178 = sadd.s32 %s177, 1
      %s179 = scalar_select %p176, %s177, %s178
      %p182 = pneg %p176
      %p183 = scmp.eq.s32.totalorder %s21, 1
      %p184 = por %p182, %p183
      %p185 = scmp.ne.s32.totalorder %s177, %s180
      %p186 = scmp.eq.s32.totalorder %s21, 0
      %p187 = por %p185, %p186
      %p188 = scmp.ne.s32.totalorder %s177, %s180
      %p189 = scmp.eq.s32.totalorder %s26, 1
      %p190 = por %p188, %p189
      %p191 = scmp.ne.s32.totalorder %s180, %s181
      %p192 = scmp.eq.s32.totalorder %s26, 0
      %p193 = por %p191, %p192
      %p194 = scmp.ne.s32.totalorder %s180, %s181
      %p195 = scmp.eq.s32.totalorder %s27, 1
      %p196 = por %p194, %p195
      %p198 = scmp.ne.s32.totalorder %s181, %s197
      %p199 = scmp.eq.s32.totalorder %s27, 0
      %p200 = por %p198, %p199
      %p201 = scmp.le.s32.totalorder 1, %s21
      %p202 = scmp.lt.s32.totalorder %s21, 3
      %p203 = pnand %p201, %p202
      %p204 = pneg %p203
      // Predicated region
      $region9: #{tpu_custom_call.1} parent=5 // pred_check
        _
      $region10: #{tpu_custom_call.1} parent=5 // pred_check_branch
        %206 = sbr.rel (%p203) target = $region12
      $region11: #{tpu_custom_call.1} parent=5 // pred_region
        %s207 = ssub.s32 %s21, 1
        // Predicated region
        $region13: #{tpu_custom_call.1} parent=11 // pred_check
          %p208 = pneg %p146
        $region14: #{tpu_custom_call.1} parent=11 // pred_check_branch
          %210 = sbr.rel (%p208) target = $region16
        $region15: #{tpu_custom_call.1} parent=11 // pred_region
          _
        $region16: #{tpu_custom_call.1} parent=11 // pred_fallthru
          _
        // Predicated region
        $region17: #{tpu_custom_call.1} parent=11 // pred_check
          %p211 = pneg %p167
        $region18: #{tpu_custom_call.1} parent=11 // pred_check_branch
          %213 = sbr.rel (%p211) target = $region20
        $region19: #{tpu_custom_call.1} parent=11 // pred_region
          _
        $region20: #{tpu_custom_call.1} parent=11 // pred_fallthru
          _
      $region12: #{tpu_custom_call.1} parent=5 // pred_fallthru
        _
      %p214 = scmp.lt.s32.totalorder %s21, 2
      // Predicated region
      $region21: #{tpu_custom_call.1} parent=5 // pred_check
        %p215 = pneg %p214
      $region22: #{tpu_custom_call.1} parent=5 // pred_check_branch
        %217 = sbr.rel (%p215) target = $region24
      $region23: #{tpu_custom_call.1} parent=5 // pred_region
        // Predicated region
        $region25: #{tpu_custom_call.1} parent=23 // pred_check
          %p218 = pneg %p41
        $region26: #{tpu_custom_call.1} parent=23 // pred_check_branch
          %220 = sbr.rel (%p218) target = $region28
        $region27: #{tpu_custom_call.1} parent=23 // pred_region
          %p221 = scmp.lt.s32.totalorder %s21, 1
          %s222 = scalar_select %p221, %s21, 1
          %s223 = smul.addr %s222, 8
          %s224 = scalar_lea.vmem %s0, %s223
        $region28: #{tpu_custom_call.1} parent=23 // pred_fallthru
          _
        // Predicated region
        $region29: #{tpu_custom_call.1} parent=23 // pred_check
          %p225 = pneg %p67
        $region30: #{tpu_custom_call.1} parent=23 // pred_check_branch
          %227 = sbr.rel (%p225) target = $region32
        $region31: #{tpu_custom_call.1} parent=23 // pred_region
          %p228 = scmp.lt.s32.totalorder %s21, 1
          %s229 = scalar_select %p228, %s21, 1
          %s230 = smul.addr %s229, 8
          %s231 = scalar_lea.vmem %s1, %s230
        $region32: #{tpu_custom_call.1} parent=23 // pred_fallthru
          _
        // Predicated region
        $region33: #{tpu_custom_call.1} parent=23 // pred_check
          %p232 = pneg %p93
        $region34: #{tpu_custom_call.1} parent=23 // pred_check_branch
          %234 = sbr.rel (%p232) target = $region36
        $region35: #{tpu_custom_call.1} parent=23 // pred_region
          %s235 = sand.u32 %s83, 1
          %s236 = scalar_lea.sflag [#allocation3], %s235
          %s237 = sand.u32 %s83, 1
          %s238 = smul.addr %s237, 8
          %s239 = scalar_lea.vmem [#allocation2], %s238
          %s241 = ssub.s32 128, 128
          %242 = vsyncadd %s236, %s241
          %s243 = smul.addr %s21, 128
          %s244 = scalar_lea.hbm %s2, %s243
          %s246 = sshll.u32 %s239, 4
          %s247 = int_to_ptr.vmem [resolvable:$true] %s246
          %249 = dma.hbm_to_vmem [thread:$0]  %s244, 128, %s247, %s236
        $region36: #{tpu_custom_call.1} parent=23 // pred_fallthru
          _
        // Predicated region
        $region37: #{tpu_custom_call.1} parent=23 // pred_check
          %p250 = pneg %p119
        $region38: #{tpu_custom_call.1} parent=23 // pred_check_branch
          %252 = sbr.rel (%p250) target = $region40
        $region39: #{tpu_custom_call.1} parent=23 // pred_region
          %s253 = sand.u32 %s109, 1
          %s254 = scalar_lea.sflag [#allocation6], %s253
          %s255 = sand.u32 %s109, 1
          %s256 = smul.addr %s255, 8
          %s257 = scalar_lea.vmem [#allocation5], %s256
          %s259 = ssub.s32 128, 128
          %260 = vsyncadd %s254, %s259
          %s261 = smul.addr %s21, 128
          %s262 = scalar_lea.hbm %s3, %s261
          %s264 = sshll.u32 %s257, 4
          %s265 = int_to_ptr.vmem [resolvable:$true] %s264
          %267 = dma.hbm_to_vmem [thread:$0]  %s262, 128, %s265, %s254
        $region40: #{tpu_custom_call.1} parent=23 // pred_fallthru
          _
      $region24: #{tpu_custom_call.1} parent=5 // pred_fallthru
        _
      %p268 = scmp.le.s32.totalorder 1, %s21
      %p269 = scmp.lt.s32.totalorder %s21, 3
      %p270 = pnand %p268, %p269
      %p271 = pneg %p270
      // Predicated region
      $region41: #{tpu_custom_call.1} parent=5 // pred_check
        _
      $region42: #{tpu_custom_call.1} parent=5 // pred_check_branch
        %273 = sbr.rel (%p270) target = $region44
      $region43: #{tpu_custom_call.1} parent=5 // pred_region
        %s274 = ssub.s32 %s21, 1
        %s275 = sand.u32 %s86, 1
        %s276 = scalar_lea.sflag [#allocation3], %s275
        %s277 = sand.u32 %s86, 1
        %s278 = smul.addr %s277, 8
        %s279 = scalar_lea.vmem [#allocation2], %s278
        // Predicated region
        $region45: #{tpu_custom_call.1} parent=43 // pred_check
          %p280 = pneg %p99
        $region46: #{tpu_custom_call.1} parent=43 // pred_check_branch
          %282 = sbr.rel (%p280) target = $region48
        $region47: #{tpu_custom_call.1} parent=43 // pred_region
          %283 = dma.done %s276, 128
        $region48: #{tpu_custom_call.1} parent=43 // pred_fallthru
          _
        %s284 = sand.u32 %s112, 1
        %s285 = scalar_lea.sflag [#allocation6], %s284
        %s286 = sand.u32 %s112, 1
        %s287 = smul.addr %s286, 8
        %s288 = scalar_lea.vmem [#allocation5], %s287
        // Predicated region
        $region49: #{tpu_custom_call.1} parent=43 // pred_check
          %p289 = pneg %p125
        $region50: #{tpu_custom_call.1} parent=43 // pred_check_branch
          %291 = sbr.rel (%p289) target = $region52
        $region51: #{tpu_custom_call.1} parent=43 // pred_region
          %292 = dma.done %s285, 128
        $region52: #{tpu_custom_call.1} parent=43 // pred_fallthru
          _
        %p293 = scmp.lt.s32.totalorder %s26, 1
        %s294 = scalar_select %p293, %s26, 1
        %s295 = smul.addr %s294, 8
        %s296 = scalar_lea.vmem %s0, %s295
        %p297 = pneg %p47
        %p298 = pneg %p44
        %p299 = scmp.lt.s32.totalorder %s26, 1
        %s300 = scalar_select %p299, %s26, 1
        %s301 = smul.addr %s300, 8
        %s302 = scalar_lea.vmem %s1, %s301
        %p303 = pneg %p73
        %p304 = pneg %p70
        %s305 = sand.u32 %s86, 1
        %s306 = scalar_lea.sflag [#allocation3], %s305
        %s307 = sand.u32 %s86, 1
        %s308 = smul.addr %s307, 8
        %s309 = scalar_lea.vmem [#allocation2], %s308
        %p310 = pneg %p99
        %p311 = pneg %p96
        %s312 = sand.u32 %s112, 1
        %s313 = scalar_lea.sflag [#allocation6], %s312
        %s314 = sand.u32 %s112, 1
        %s315 = smul.addr %s314, 8
        %s316 = scalar_lea.vmem [#allocation5], %s315
        %p317 = pneg %p125
        %p318 = pneg %p122
        %p319 = pneg %p146
        %p320 = pneg %p143
        %p321 = pneg %p167
        %p322 = pneg %p164
        %p323 = pneg %p193
        %p324 = pneg %p190
        %s325 = sand.u32 %s180, 1
        %s326 = scalar_lea.sflag [#allocation4], %s325
        %s327 = sand.u32 %s180, 1
        %s328 = smul.addr %s327, 8
        %s329 = scalar_lea.vmem [#allocation7], %s328
        %p330 = scmp.lt.s32.totalorder %s26, 1
        %s331 = scalar_select %p330, %s26, 1
        %s332 = smul.addr %s331, 8
        %s333 = scalar_lea.vmem %s0, %s332
        %p334 = scmp.lt.s32.totalorder %s26, 1
        %s335 = scalar_select %p334, %s26, 1
        %s336 = smul.addr %s335, 8
        %s337 = scalar_lea.vmem %s1, %s336
        %v339 = vld [vmem:[%s333] sm:$0xff]
        %v340 = vpack.c.bf16 %v339, %v339
        %v341 = vld [vmem:[%s337] sm:$0xff]
        %v342 = vpack.c.bf16 %v341, %v341
        %v343 = vld [vmem:[%s279] sm:$0xff]
        %v344 = vpack.c.bf16 %v343, %v343
        %v345 = vld [vmem:[%s288] sm:$0xff]
        %v346 = vpack.c.bf16 %v345, %v345
        %v348 = vrot.slane %v342, 4
        %v350 = vrot.slane %v346, 4
        %vm351 = vcmask 1043456
        %v354 = vsel %vm351, %v340, %v348
        %v357 = vsel %vm351, %v344, %v350
        %v358 = vld [vmem:[%s5 + $0x10] sm:$0x1]
        %v359 = vld [vmem:[%s5 + $0x18] sm:$0x1]
        %v360 = vld [vmem:[%s5 + $0x20] sm:$0x1]
        %v361 = vld [vmem:[%s4] sm:$0xf]
        %v362 = vld [vmem:[%s4 + $0x4] sm:$0xf]
        %v363 = vld [vmem:[%s4 + $0x8] sm:$0xf]
        %v364 = vld [vmem:[%s4 + $0xc] sm:$0xf]
        %v365 = vld [vmem:[%s5] sm:$0x1]
        %v366 = vlaneseq
        %v367 = vshrl.u32 %v366, 7
        %v368 = vsub.s32 0, %v367
        %v369 = vrot.slane %v365, %v368
        %v374 = vunpack.c.l.b16 %v361
        %v375 = vunpack.c.l.b16 %v362
        %v376 = vunpack.c.l.b16 %v363
        %v377 = vunpack.c.l.b16 %v364
        %v378 = vpack.c.b16 %v375, %v374
        %v379 = vpack.c.b16 %v377, %v376
        %vm382 = vcmask 261120
        %v383 = vsel %vm382, %v354, 0
        %v385 = vsel %vm382, %v357, 0
        %387 = vmatprep.subr.bf16.mxu0 0
        %388 = vmatpush1.bf16.msra.mxu0 0
        %389 = vmatprep.subr.bf16.mxu0 0
        %390 = vmatpush1.bf16.msra.mxu0 0
        %391 = vmatprep.subr.bf16.mxu0 0
        %392 = vmatpush1.bf16.msra.mxu0 0
        %393 = vmatprep.subr.bf16.mxu0 0
        %394 = vmatpush1.bf16.msra.mxu0 0
        %395 = vmatprep.subr.bf16.mxu0 0
        %396 = vmatpush1.bf16.msra.mxu0 0
        %397 = vmatprep.subr.bf16.mxu0 0
        %398 = vmatpush1.bf16.msra.mxu0 0
        %399 = vmatprep.subr.bf16.mxu0 0
        %400 = vmatpush1.bf16.msra.mxu0 %v379
        %401 = vmatprep.subr.bf16.mxu0 0
        %402 = vmatpush1.bf16.msra.mxu0 %v378
        %403 = vmatprep.subr.bf16.mxu0 0
        %404 = vmatpush2.bf16.msra.mxu0 0
        %405 = vmatprep.subr.bf16.mxu0 0
        %406 = vmatpush2.bf16.msra.mxu0 0
        %407 = vmatprep.subr.bf16.mxu0 0
        %408 = vmatpush2.bf16.msra.mxu0 0
        %409 = vmatprep.subr.bf16.mxu0 0
        %410 = vmatpush2.bf16.msra.mxu0 0
        %411 = vmatprep.subr.bf16.mxu0 0
        %412 = vmatpush2.bf16.msra.mxu0 0
        %413 = vmatprep.subr.bf16.mxu0 0
        %414 = vmatpush2.bf16.msra.mxu0 0
        %415 = vmatprep.subr.bf16.mxu0 0
        %416 = vmatpush2.bf16.msra.mxu0 0
        %417 = vmatprep.subr.bf16.mxu0 0
        %418 = vmatpush2.bf16.msra.mxu0 0
        %419 = vmatprep.mubr.bf16.mxu0 0
        %420 = vmatmul.mubr.bf16.gmra.mxu0 %v383
        %v421 = vpop.f32.mrf.mxu0
        %v422 = vadd.f32 %v369, %v421
        %v423 = vpop.f32.mrf.mxu0
        %v424 = vpop.f32.mrf.mxu0
        %v425 = vadd.f32 %v369, %v424
        %v426 = vpop.f32.mrf.mxu0
        %427 = vmatprep.mubr.bf16.mxu0 0
        %428 = vmatmul.mubr.bf16.gmra.mxu0 %v385
        %v429 = vpop.f32.mrf.mxu0
        %v430 = vadd.f32 %v369, %v429
        %v431 = vpop.f32.mrf.mxu0
        %v432 = vpop.f32.mrf.mxu0
        %v433 = vadd.f32 %v369, %v432
        %v434 = vpop.f32.mrf.mxu0
        %435 = vdwg.mxu0
        %v436 = vmax.f32 %v422, 0.0
        %v437 = vmax.f32 %v425, 0.0
        %v438 = vmax.f32 %v430, 0.0
        %v439 = vmax.f32 %v433, 0.0
        %v440 = vsel %vm382, %v436, 0.0
        %441 = vadd.xlane.f32.xlu0 %v440
        %v442 = vpop.xlane.xlu0 %441
        %v443 = vsel %vm382, %v437, 0.0
        %444 = vadd.xlane.f32.xlu0 %v443
        %v445 = vpop.xlane.xlu0 %444
        %v446 = vsel %vm382, %v438, 0.0
        %447 = vadd.xlane.f32.xlu0 %v446
        %v448 = vpop.xlane.xlu0 %447
        %v449 = vsel %vm382, %v439, 0.0
        %450 = vadd.xlane.f32.xlu0 %v449
        %v451 = vpop.xlane.xlu0 %450
        %v452 = vrcp.pop 32.0
        %v453 = vmul.f32 %v442, %v452
        %v454 = vmul.f32 %v445, %v452
        %v455 = vmul.f32 %v448, %v452
        %v456 = vmul.f32 %v451, %v452
        %v457 = vsub.f32 %v436, %v453
        %v458 = vsub.f32 %v437, %v454
        %v459 = vsub.f32 %v438, %v455
        %v460 = vsub.f32 %v439, %v456
        %v461 = vmul.f32 %v457, %v457
        %v462 = vmul.f32 %v458, %v458
        %v463 = vmul.f32 %v459, %v459
        %v464 = vmul.f32 %v460, %v460
        %v465 = vsel %vm382, %v461, 0.0
        %466 = vadd.xlane.f32.xlu0 %v465
        %v467 = vpop.xlane.xlu0 %466
        %v468 = vsel %vm382, %v462, 0.0
        %469 = vadd.xlane.f32.xlu0 %v468
        %v470 = vpop.xlane.xlu0 %469
        %v471 = vsel %vm382, %v463, 0.0
        %472 = vadd.xlane.f32.xlu0 %v471
        %v473 = vpop.xlane.xlu0 %472
        %v474 = vsel %vm382, %v464, 0.0
        %475 = vadd.xlane.f32.xlu0 %v474
        %v476 = vpop.xlane.xlu0 %475
        %v477 = vmul.f32 %v467, %v452
        %v478 = vmul.f32 %v470, %v452
        %v479 = vmul.f32 %v473, %v452
        %v480 = vmul.f32 %v476, %v452
        %v481 = vadd.f32 %v477, 1e-05
        %v482 = vadd.f32 %v478, 1e-05
        %v483 = vadd.f32 %v479, 1e-05
        %v484 = vadd.f32 %v480, 1e-05
        %v485 = vrsqrt.pop %v481
        %v486 = vrsqrt.pop %v482
        %v487 = vrsqrt.pop %v483
        %v488 = vrsqrt.pop %v484
        %v489 = vlaneseq
        %v490 = vshrl.u32 %v489, 7
        %v491 = vsub.s32 0, %v490
        %v492 = vrot.slane %v358, %v491
        %v493 = vmul.f32 %v492, %v485
        %v494 = vmul.f32 %v492, %v486
        %v495 = vmul.f32 %v492, %v487
        %v496 = vmul.f32 %v492, %v488
        %v497 = vmul.f32 %v457, %v493
        %v498 = vmul.f32 %v458, %v494
        %v499 = vmul.f32 %v459, %v495
        %v500 = vmul.f32 %v460, %v496
        %v501 = vlaneseq
        %v502 = vshrl.u32 %v501, 7
        %v503 = vsub.s32 0, %v502
        %v504 = vrot.slane %v359, %v503
        %v505 = vadd.f32 %v497, %v504
        %v506 = vadd.f32 %v498, %v504
        %v507 = vadd.f32 %v499, %v504
        %v508 = vadd.f32 %v500, %v504
        %v509 = vlaneseq
        %v510 = vshrl.u32 %v509, 7
        %v511 = vsub.s32 0, %v510
        %v512 = vrot.slane %v360, %v511
        %v513 = vmul.f32 %v436, %v512
        %v514 = vmul.f32 %v437, %v512
        %v515 = vmul.f32 %v438, %v512
        %v516 = vmul.f32 %v439, %v512
        %v517 = vadd.f32 %v505, %v513
        %v518 = vadd.f32 %v506, %v514
        %v519 = vadd.f32 %v507, %v515
        %v520 = vadd.f32 %v508, %v516
        %v521 = vpack.c.bf16 %v518, %v517
        %v522 = vpack.c.bf16 %v520, %v519
        %v523 = vld [vmem:[%s4 + $0x10] sm:$0xf]
        %v524 = vld [vmem:[%s4 + $0x14] sm:$0xf]
        %v525 = vld [vmem:[%s4 + $0x18] sm:$0xf]
        %v526 = vld [vmem:[%s4 + $0x1c] sm:$0xf]
        %v527 = vld [vmem:[%s4 + $0x20] sm:$0xf]
        %v528 = vld [vmem:[%s4 + $0x24] sm:$0xf]
        %v529 = vld [vmem:[%s4 + $0x28] sm:$0xf]
        %v530 = vld [vmem:[%s4 + $0x2c] sm:$0xf]
        %v531 = vld [vmem:[%s5 + $0x8] sm:$0x1]
        %v532 = vlaneseq
        %v533 = vshrl.u32 %v532, 7
        %v534 = vsub.s32 0, %v533
        %v535 = vrot.slane %v531, %v534
        %v544 = vunpack.c.l.b16 %v523
        %v545 = vunpack.c.l.b16 %v524
        %v546 = vunpack.c.l.b16 %v525
        %v547 = vunpack.c.l.b16 %v526
        %v548 = vunpack.c.l.b16 %v527
        %v549 = vunpack.c.l.b16 %v528
        %v550 = vunpack.c.l.b16 %v529
        %v551 = vunpack.c.l.b16 %v530
        %v552 = vpack.c.b16 %v545, %v544
        %v553 = vpack.c.b16 %v547, %v546
        %v554 = vpack.c.b16 %v549, %v548
        %v555 = vpack.c.b16 %v551, %v550
        %vm560 = vcmask 523264
        %v562 = vsel %vm560, %v521, 0
        %v565 = vsel %vm560, %v522, 0
        %567 = vmatprep.subr.bf16.mxu0 0
        %568 = vmatpush1.bf16.msra.mxu0 0
        %569 = vmatprep.subr.bf16.mxu0 0
        %570 = vmatpush1.bf16.msra.mxu0 0
        %571 = vmatprep.subr.bf16.mxu0 0
        %572 = vmatpush1.bf16.msra.mxu0 0
        %573 = vmatprep.subr.bf16.mxu0 0
        %574 = vmatpush1.bf16.msra.mxu0 0
        %575 = vmatprep.subr.bf16.mxu0 0
        %576 = vmatpush1.bf16.msra.mxu0 %v555
        %577 = vmatprep.subr.bf16.mxu0 0
        %578 = vmatpush1.bf16.msra.mxu0 %v554
        %579 = vmatprep.subr.bf16.mxu0 0
        %580 = vmatpush1.bf16.msra.mxu0 %v553
        %581 = vmatprep.subr.bf16.mxu0 0
        %582 = vmatpush1.bf16.msra.mxu0 %v552
        %583 = vmatprep.subr.bf16.mxu0 0
        %584 = vmatpush2.bf16.msra.mxu0 0
        %585 = vmatprep.subr.bf16.mxu0 0
        %586 = vmatpush2.bf16.msra.mxu0 0
        %587 = vmatprep.subr.bf16.mxu0 0
        %588 = vmatpush2.bf16.msra.mxu0 0
        %589 = vmatprep.subr.bf16.mxu0 0
        %590 = vmatpush2.bf16.msra.mxu0 0
        %591 = vmatprep.subr.bf16.mxu0 0
        %592 = vmatpush2.bf16.msra.mxu0 0
        %593 = vmatprep.subr.bf16.mxu0 0
        %594 = vmatpush2.bf16.msra.mxu0 0
        %595 = vmatprep.subr.bf16.mxu0 0
        %596 = vmatpush2.bf16.msra.mxu0 0
        %597 = vmatprep.subr.bf16.mxu0 0
        %598 = vmatpush2.bf16.msra.mxu0 0
        %599 = vmatprep.mubr.bf16.mxu0 0
        %600 = vmatmul.mubr.bf16.gmra.mxu0 %v562
        %v601 = vpop.f32.mrf.mxu0
        %v602 = vadd.f32 %v535, %v601
        %v603 = vpop.f32.mrf.mxu0
        %v604 = vpop.f32.mrf.mxu0
        %v605 = vadd.f32 %v535, %v604
        %v606 = vpop.f32.mrf.mxu0
        %607 = vmatprep.mubr.bf16.mxu0 0
        %608 = vmatmul.mubr.bf16.gmra.mxu0 %v565
        %v609 = vpop.f32.mrf.mxu0
        %v610 = vadd.f32 %v535, %v609
        %v611 = vpop.f32.mrf.mxu0
        %v612 = vpop.f32.mrf.mxu0
        %v613 = vadd.f32 %v535, %v612
        %v614 = vpop.f32.mrf.mxu0
        %615 = vdwg.mxu0
        %v616 = vmax.f32 %v602, 0.0
        %v617 = vmax.f32 %v605, 0.0
        %v618 = vmax.f32 %v610, 0.0
        %v619 = vmax.f32 %v613, 0.0
        %v620 = vsel %vm382, %v616, 0.0
        %621 = vadd.xlane.f32.xlu0 %v620
        %v622 = vpop.xlane.xlu0 %621
        %v623 = vsel %vm382, %v617, 0.0
        %624 = vadd.xlane.f32.xlu0 %v623
        %v625 = vpop.xlane.xlu0 %624
        %v626 = vsel %vm382, %v618, 0.0
        %627 = vadd.xlane.f32.xlu0 %v626
        %v628 = vpop.xlane.xlu0 %627
        %v629 = vsel %vm382, %v619, 0.0
        %630 = vadd.xlane.f32.xlu0 %v629
        %v631 = vpop.xlane.xlu0 %630
        %v632 = vmul.f32 %v622, %v452
        %v633 = vmul.f32 %v625, %v452
        %v634 = vmul.f32 %v628, %v452
        %v635 = vmul.f32 %v631, %v452
        %v636 = vsub.f32 %v616, %v632
        %v637 = vsub.f32 %v617, %v633
        %v638 = vsub.f32 %v618, %v634
        %v639 = vsub.f32 %v619, %v635
        %v640 = vmul.f32 %v636, %v636
        %v641 = vmul.f32 %v637, %v637
        %v642 = vmul.f32 %v638, %v638
        %v643 = vmul.f32 %v639, %v639
        %v644 = vsel %vm382, %v640, 0.0
        %645 = vadd.xlane.f32.xlu0 %v644
        %v646 = vpop.xlane.xlu0 %645
        %v647 = vsel %vm382, %v641, 0.0
        %648 = vadd.xlane.f32.xlu0 %v647
        %v649 = vpop.xlane.xlu0 %648
        %v650 = vsel %vm382, %v642, 0.0
        %651 = vadd.xlane.f32.xlu0 %v650
        %v652 = vpop.xlane.xlu0 %651
        %v653 = vsel %vm382, %v643, 0.0
        %654 = vadd.xlane.f32.xlu0 %v653
        %v655 = vpop.xlane.xlu0 %654
        %v656 = vmul.f32 %v646, %v452
        %v657 = vmul.f32 %v649, %v452
        %v658 = vmul.f32 %v652, %v452
        %v659 = vmul.f32 %v655, %v452
        %v660 = vadd.f32 %v656, 1e-05
        %v661 = vadd.f32 %v657, 1e-05
        %v662 = vadd.f32 %v658, 1e-05
        %v663 = vadd.f32 %v659, 1e-05
        %v664 = vrsqrt.pop %v660
        %v665 = vrsqrt.pop %v661
        %v666 = vrsqrt.pop %v662
        %v667 = vrsqrt.pop %v663
        %v668 = vmul.f32 %v492, %v664
        %v669 = vmul.f32 %v492, %v665
        %v670 = vmul.f32 %v492, %v666
        %v671 = vmul.f32 %v492, %v667
        %v672 = vmul.f32 %v636, %v668
        %v673 = vmul.f32 %v637, %v669
        %v674 = vmul.f32 %v638, %v670
        %v675 = vmul.f32 %v639, %v671
        %v676 = vadd.f32 %v672, %v504
        %v677 = vadd.f32 %v673, %v504
        %v678 = vadd.f32 %v674, %v504
        %v679 = vadd.f32 %v675, %v504
        %v680 = vmul.f32 %v616, %v512
        %v681 = vmul.f32 %v617, %v512
        %v682 = vmul.f32 %v618, %v512
        %v683 = vmul.f32 %v619, %v512
        %v684 = vadd.f32 %v676, %v680
        %v685 = vadd.f32 %v677, %v681
        %v686 = vadd.f32 %v678, %v682
        %v687 = vadd.f32 %v679, %v683
        %v688 = vld [vmem:[%s5 + $0x28] sm:$0x1]
        %v689 = vlaneseq
        %v690 = vshrl.u32 %v689, 7
        %v691 = vsub.s32 0, %v690
        %v692 = vrot.slane %v688, %v691
        %v693 = vmul.f32 %v684, %v692
        %v694 = vmul.f32 %v685, %v692
        %v695 = vmul.f32 %v686, %v692
        %v696 = vmul.f32 %v687, %v692
        %v697 = vsel %vm560, %v693, 0.0
        %698 = vadd.xlane.f32.xlu0 %v697
        %v699 = vpop.xlane.xlu0 %698
        %v700 = vsel %vm560, %v694, 0.0
        %701 = vadd.xlane.f32.xlu0 %v700
        %v702 = vpop.xlane.xlu0 %701
        %v703 = vsel %vm560, %v695, 0.0
        %704 = vadd.xlane.f32.xlu0 %v703
        %v705 = vpop.xlane.xlu0 %704
        %v706 = vsel %vm560, %v696, 0.0
        %707 = vadd.xlane.f32.xlu0 %v706
        %v708 = vpop.xlane.xlu0 %707
        %v709 = vld [vmem:[%s5 + $0x30] sm:$0x1]
        %v710 = vlaneseq
        %v711 = vshrl.u32 %v710, 7
        %v712 = vsub.s32 0, %v711
        %v713 = vrot.slane %v709, %v712
        %v714 = vadd.f32 %v699, %v713
        %v715 = vadd.f32 %v702, %v713
        %v716 = vadd.f32 %v705, %v713
        %v717 = vadd.f32 %v708, %v713
        %v718 = vpack.c.bf16 %v685, %v684
        %v719 = vpack.c.bf16 %v687, %v686
        %v720 = vld [vmem:[%s4 + $0x30] sm:$0xf]
        %v721 = vld [vmem:[%s4 + $0x34] sm:$0xf]
        %v722 = vld [vmem:[%s4 + $0x38] sm:$0xf]
        %v723 = vld [vmem:[%s4 + $0x3c] sm:$0xf]
        %v724 = vld [vmem:[%s5 + $0x38] sm:$0x1]
        %v725 = vlaneseq
        %v726 = vshrl.u32 %v725, 7
        %v727 = vsub.s32 0, %v726
        %v728 = vrot.slane %v724, %v727
        %731 = vrot.lane.b32.xlu0 %v718, 96
        %v732 = vpop.permute.xlu0 %731
        %733 = vrot.lane.b32.xlu0 %v719, 96
        %v734 = vpop.permute.xlu0 %733
        %v739 = vunpack.c.l.b16 %v720
        %v740 = vunpack.c.l.b16 %v721
        %v741 = vunpack.c.l.b16 %v722
        %v742 = vunpack.c.l.b16 %v723
        %v743 = vpack.c.b16 %v740, %v739
        %v744 = vpack.c.b16 %v742, %v741
        %v748 = vsel %vm382, %v732, 0
        %v751 = vsel %vm382, %v734, 0
        %753 = vmatprep.subr.bf16.mxu0 0
        %754 = vmatpush1.bf16.msra.mxu0 0
        %755 = vmatprep.subr.bf16.mxu0 0
        %756 = vmatpush1.bf16.msra.mxu0 0
        %757 = vmatprep.subr.bf16.mxu0 0
        %758 = vmatpush1.bf16.msra.mxu0 0
        %759 = vmatprep.subr.bf16.mxu0 0
        %760 = vmatpush1.bf16.msra.mxu0 0
        %761 = vmatprep.subr.bf16.mxu0 0
        %762 = vmatpush1.bf16.msra.mxu0 0
        %763 = vmatprep.subr.bf16.mxu0 0
        %764 = vmatpush1.bf16.msra.mxu0 0
        %765 = vmatprep.subr.bf16.mxu0 0
        %766 = vmatpush1.bf16.msra.mxu0 %v744
        %767 = vmatprep.subr.bf16.mxu0 0
        %768 = vmatpush1.bf16.msra.mxu0 %v743
        %769 = vmatprep.subr.bf16.mxu0 0
        %770 = vmatpush2.bf16.msra.mxu0 0
        %771 = vmatprep.subr.bf16.mxu0 0
        %772 = vmatpush2.bf16.msra.mxu0 0
        %773 = vmatprep.subr.bf16.mxu0 0
        %774 = vmatpush2.bf16.msra.mxu0 0
        %775 = vmatprep.subr.bf16.mxu0 0
        %776 = vmatpush2.bf16.msra.mxu0 0
        %777 = vmatprep.subr.bf16.mxu0 0
        %778 = vmatpush2.bf16.msra.mxu0 0
        %779 = vmatprep.subr.bf16.mxu0 0
        %780 = vmatpush2.bf16.msra.mxu0 0
        %781 = vmatprep.subr.bf16.mxu0 0
        %782 = vmatpush2.bf16.msra.mxu0 0
        %783 = vmatprep.subr.bf16.mxu0 0
        %784 = vmatpush2.bf16.msra.mxu0 0
        %785 = vmatprep.mubr.bf16.mxu0 0
        %786 = vmatmul.mubr.bf16.gmra.mxu0 %v748
        %v787 = vpop.f32.mrf.mxu0
        %v788 = vadd.f32 %v728, %v787
        %v789 = vpop.f32.mrf.mxu0
        %v790 = vpop.f32.mrf.mxu0
        %v791 = vadd.f32 %v728, %v790
        %v792 = vpop.f32.mrf.mxu0
        %793 = vmatprep.mubr.bf16.mxu0 0
        %794 = vmatmul.mubr.bf16.gmra.mxu0 %v751
        %v795 = vpop.f32.mrf.mxu0
        %v796 = vadd.f32 %v728, %v795
        %v797 = vpop.f32.mrf.mxu0
        %v798 = vpop.f32.mrf.mxu0
        %v799 = vadd.f32 %v728, %v798
        %v800 = vpop.f32.mrf.mxu0
        %801 = vdwg.mxu0
        %v802 = vmax.f32 %v714, %v715
        %v803 = vmax.f32 %v802, %v716
        %v804 = vmax.f32 %v803, %v717
        %v805 = vsub.f32 %v714, %v804
        %v806 = vmul.f32 %v805, 1.442695
        %v807 = vpow.pop %v806
        %v808 = vsub.f32 %v715, %v804
        %v809 = vmul.f32 %v808, 1.442695
        %v810 = vpow.pop %v809
        %v811 = vadd.f32 %v807, %v810
        %v812 = vsub.f32 %v716, %v804
        %v813 = vmul.f32 %v812, 1.442695
        %v814 = vpow.pop %v813
        %v815 = vadd.f32 %v811, %v814
        %v816 = vsub.f32 %v717, %v804
        %v817 = vmul.f32 %v816, 1.442695
        %v818 = vpow.pop %v817
        %v819 = vadd.f32 %v815, %v818
        %v820 = vrcp.pop %v819
        %v821 = vmul.f32 %v807, %v820
        %823 = vset.pattern.permute.xlu0 0
        %824 = vperm.xlu0 %823, %v821
        %v825 = vpop.permute.xlu0 %824
        %v827 = vmul.f32 %v825, %v788
        %v828 = vmul.f32 %v810, %v820
        %830 = vset.pattern.permute.xlu0 0
        %831 = vperm.xlu0 %830, %v828
        %v832 = vpop.permute.xlu0 %831
        %v834 = vmul.f32 %v832, %v791
        %v835 = vadd.f32 %v827, %v834
        %v836 = vmul.f32 %v814, %v820
        %838 = vset.pattern.permute.xlu0 0
        %839 = vperm.xlu0 %838, %v836
        %v840 = vpop.permute.xlu0 %839
        %v842 = vmul.f32 %v840, %v796
        %v843 = vadd.f32 %v835, %v842
        %v844 = vmul.f32 %v818, %v820
        %846 = vset.pattern.permute.xlu0 0
        %847 = vperm.xlu0 %846, %v844
        %v848 = vpop.permute.xlu0 %847
        %v850 = vmul.f32 %v848, %v799
        %v851 = vadd.f32 %v843, %v850
        %852 = vst.msk [vmem:[%s329] sm:$0xff] %vm382, %v851
        %s853 = sand.u32 %s180, 1
        %s854 = scalar_lea.sflag [#allocation4], %s853
        %s855 = sand.u32 %s180, 1
        %s856 = smul.addr %s855, 8
        %s857 = scalar_lea.vmem [#allocation7], %s856
        // Predicated region
        $region53: #{tpu_custom_call.1} parent=43 // pred_check
          %p858 = pneg %p190
        $region54: #{tpu_custom_call.1} parent=43 // pred_check_branch
          %860 = sbr.rel (%p858) target = $region56
        $region55: #{tpu_custom_call.1} parent=43 // pred_region
          %s862 = ssub.s32 128, 128
          %863 = vsyncadd %s854, %s862
          %s864 = smul.addr %s26, 128
          %s865 = scalar_lea.hbm %s6, %s864
          %s867 = sshll.u32 %s857, 4
          %s868 = int_to_ptr.vmem [resolvable:$true] %s867
          %870 = dma.vmem_to_hbm [thread:$0]  %s868, 128, %s865, %s854
        $region56: #{tpu_custom_call.1} parent=43 // pred_fallthru
          _
      $region44: #{tpu_custom_call.1} parent=5 // pred_fallthru
        _
      %p871 = scmp.le.s32.totalorder 2, %s21
      // Predicated region
      $region57: #{tpu_custom_call.1} parent=5 // pred_check
        %p872 = pneg %p871
      $region58: #{tpu_custom_call.1} parent=5 // pred_check_branch
        %874 = sbr.rel (%p872) target = $region60
      $region59: #{tpu_custom_call.1} parent=5 // pred_region
        %s875 = ssub.s32 %s21, 2
        // Predicated region
        $region61: #{tpu_custom_call.1} parent=59 // pred_check
          %p876 = pneg %p196
        $region62: #{tpu_custom_call.1} parent=59 // pred_check_branch
          %878 = sbr.rel (%p876) target = $region64
        $region63: #{tpu_custom_call.1} parent=59 // pred_region
          %s879 = sand.u32 %s181, 1
          %s880 = scalar_lea.sflag [#allocation4], %s879
          %s881 = sand.u32 %s181, 1
          %s882 = smul.addr %s881, 8
          %s883 = scalar_lea.vmem [#allocation7], %s882
          %884 = dma.done %s880, 128
        $region64: #{tpu_custom_call.1} parent=59 // pred_fallthru
          _
      $region60: #{tpu_custom_call.1} parent=5 // pred_fallthru
        _
    $region6: #{tpu_custom_call.1} parent=1 // loop_footer
      %s25 = sadd.s32 1, %s21
    $region7: #{tpu_custom_call.1} parent=1 // loop_footer_branch
      %20 = sbr.rel target = $region3
    $region8: #{tpu_custom_call.1} parent=1 // loop_exit
      _
    %885 = vsyncpa [#allocation3], 1
    %s886 = scalar_lea.sflag [#allocation3], 1
    %887 = vsyncpa %s886, 1
    %888 = vsyncpa [#allocation6], 1
    %s889 = scalar_lea.sflag [#allocation6], 1
    %890 = vsyncpa %s889, 1
    %891 = vsyncpa [#allocation4], 1
    %s892 = scalar_lea.sflag [#allocation4], 1
    %893 = vsyncpa %s892, 1

</llo_original>
